<compile_context>
chip_gen: v5e
topology: v5e:2x2
jax: 0.10.0
libtpu: 0.0.40
codegen_flags: <defaults>
</compile_context>

<pallas_src>
import math
import functools

import jax
import jax.numpy as jnp
from jax import lax
from jax.experimental import pallas as pl
from jax.experimental.pallas import tpu as pltpu


# ---------------------------------------------------------------------------
# plain-JAX glue (reshapes / padding / patch extraction)
# ---------------------------------------------------------------------------
def _round_up(x, m):
    return ((x + m - 1) // m) * m


def pad2d_as(x1, x2):
    diff_h = x2.shape[2] - x1.shape[2]
    diff_w = x2.shape[3] - x1.shape[3]
    return jnp.pad(x1, ((0, 0), (0, 0), (0, diff_h), (0, diff_w)))


def padded_cat(x1, x2, dim=1):
    return jnp.concatenate([pad2d_as(x1, x2), x2], axis=dim)


def _dilate_and_pad(x, stride, eff_pad):
    """ConvTranspose2d == (insert stride-1 zeros) + pad(k-1-p) + stride-1 conv w/ flipped kernel."""
    n, c, h, w = x.shape
    sh, sw = stride
    hd, wd = (h - 1) * sh + 1, (w - 1) * sw + 1
    y = jnp.zeros((n, c, hd, wd), x.dtype)
    y = y.at[:, :, ::sh, ::sw].set(x)
    return jnp.pad(y, ((0, 0), (0, 0), (eff_pad[0], eff_pad[0]),
                       (eff_pad[1], eff_pad[1])))


def _im2col(xp, ksize):
    kh, kw = ksize
    n, c, hp, wp = xp.shape
    ho, wo = hp - kh + 1, wp - kw + 1
    cols = []
    for i in range(kh):
        for j in range(kw):
            cols.append(xp[:, :, i:i + ho, j:j + wo])        # (N, C, Ho, Wo)
    patches = jnp.stack(cols, axis=2)                        # (N, C, kh*kw, Ho, Wo)
    patches = patches.transpose(0, 3, 4, 1, 2)               # (N, Ho, Wo, C, kh*kw)
    return patches.reshape(n * ho * wo, c * kh * kw), (n, ho, wo)


# ---------------------------------------------------------------------------
# Pass 1: fused complex conv-transpose matmul + BN-stat accumulation
# ---------------------------------------------------------------------------
def _conv_stats_kernel(p_ref, w_ref, c_ref, stats_ref):
    # (tm, Kpad) x (Kpad, 2*Cpad) -> lanes [0:Cpad)=cr, [Cpad:2*Cpad)=ci
    c = jnp.dot(p_ref[...], w_ref[...], preferred_element_type=jnp.float32)
    c_ref[...] = c

    half = c.shape[1] // 2
    s1 = jnp.sum(c, axis=0, keepdims=True)                       # sum cr | sum ci
    s2 = jnp.sum(c * c, axis=0, keepdims=True)                   # sum cr^2 | sum ci^2
    s3 = jnp.sum(c[:, :half] * c[:, half:], axis=0, keepdims=True)  # sum cr*ci

    @pl.when(pl.program_id(0) == 0)
    def _():
        stats_ref[...] = jnp.zeros_like(stats_ref)

    stats_ref[0:1, :] += s1
    stats_ref[1:2, :] += s2
    stats_ref[2:3, :half] += s3


def _run_conv_stats(p, w, tm):
    mpad, kpad = p.shape
    cw = w.shape[1]
    grid = (mpad // tm,)
    flops = int(2 * mpad * kpad * cw)
    bytes_accessed = int(p.size * p.dtype.itemsize + w.size * w.dtype.itemsize
                         + 4 * (mpad * cw + 8 * cw))
    return pl.pallas_call(
        _conv_stats_kernel,
        grid=grid,
        in_specs=[pl.BlockSpec((tm, kpad), lambda i: (i, 0)),
                  pl.BlockSpec((kpad, cw), lambda i: (0, 0))],   # weights resident
        out_specs=(pl.BlockSpec((tm, cw), lambda i: (i, 0)),
                   pl.BlockSpec((8, cw), lambda i: (0, 0))),      # resident accumulator
        out_shape=(jax.ShapeDtypeStruct((mpad, cw), jnp.float32),
                   jax.ShapeDtypeStruct((8, cw), jnp.float32)),
        compiler_params=pltpu.CompilerParams(
            # stat accumulation across M tiles -> must be sequential on one core
            dimension_semantics=("arbitrary",),
            vmem_limit_bytes=48 * 1024 * 1024),
        cost_estimate=pl.CostEstimate(flops=flops, transcendentals=0,
                                      bytes_accessed=bytes_accessed),
    )(p, w)


# ---------------------------------------------------------------------------
# Tiny per-channel kernel: finalize BN stats -> effective affine coefficients
# ---------------------------------------------------------------------------
def _bn_coef_kernel(stats_ref, par_ref, coef_ref, *, inv_m, eps):
    cpad = coef_ref.shape[1]
    s1 = stats_ref[0:1, :]
    s2 = stats_ref[1:2, :]
    s3 = stats_ref[2:3, :cpad]

    mr = s1[:, :cpad] * inv_m
    mi = s1[:, cpad:] * inv_m
    vrr = s2[:, :cpad] * inv_m - mr * mr + eps
    vii = s2[:, cpad:] * inv_m - mi * mi + eps
    vri = s3 * inv_m - mr * mi

    tau = vrr + vii
    delta = vrr * vii - vri * vri
    s = jnp.sqrt(delta)
    rst = lax.rsqrt(delta * (tau + 2.0 * s))        # == 1/(sqrt(delta)*sqrt(tau+2s))
    urr = (s + vii) * rst
    uii = (s + vrr) * rst
    uri = -vri * rst

    wrr = par_ref[0:1, :]
    wri = par_ref[1:2, :]
    wii = par_ref[2:3, :]
    br = par_ref[3:4, :]
    bi = par_ref[4:5, :]

    zrr = wrr * urr + wri * uri
    zri = wrr * uri + wri * uii
    zir = wri * urr + wii * uri
    zii = wri * uri + wii * uii

    coef_ref[0:1, :] = zrr
    coef_ref[1:2, :] = zri
    coef_ref[2:3, :] = br - zrr * mr - zri * mi     # effective real bias (mean folded in)
    coef_ref[3:4, :] = zir
    coef_ref[4:5, :] = zii
    coef_ref[5:6, :] = bi - zir * mr - zii * mi     # effective imag bias
    coef_ref[6:8, :] = jnp.zeros((2, cpad), jnp.float32)


def _run_bn_coef(stats, params, inv_m, eps):
    cw = stats.shape[1]
    cpad = params.shape[1]
    kernel = functools.partial(_bn_coef_kernel, inv_m=inv_m, eps=eps)
    return pl.pallas_call(
        kernel,
        grid=(1,),
        in_specs=[pl.BlockSpec((8, cw), lambda i: (0, 0)),
                  pl.BlockSpec((8, cpad), lambda i: (0, 0))],
        out_specs=pl.BlockSpec((8, cpad), lambda i: (0, 0)),
        out_shape=jax.ShapeDtypeStruct((8, cpad), jnp.float32),
        compiler_params=pltpu.CompilerParams(
            dimension_semantics=("arbitrary",)),
    )(stats, params)


# ---------------------------------------------------------------------------
# Pass 2: apply whitening + affine + CLeakyReLU (pure VPU, megacore-parallel)
# ---------------------------------------------------------------------------
def _bn_apply_kernel(c_ref, coef_ref, yr_ref, yi_ref, *, slope):
    half = c_ref.shape[1] // 2
    cr = c_ref[:, :half]
    ci = c_ref[:, half:]
    zrr = coef_ref[0:1, :]
    zri = coef_ref[1:2, :]
    brf = coef_ref[2:3, :]
    zir = coef_ref[3:4, :]
    zii = coef_ref[4:5, :]
    bif = coef_ref[5:6, :]

    yr = zrr * cr + zri * ci + brf
    yi = zir * cr + zii * ci + bif
    yr_ref[...] = jnp.where(yr >= 0, yr, slope * yr)
    yi_ref[...] = jnp.where(yi >= 0, yi, slope * yi)


def _run_bn_apply(c, coef, tm, slope):
    mpad, cw = c.shape
    cpad = coef.shape[1]
    grid = (mpad // tm,)
    kernel = functools.partial(_bn_apply_kernel, slope=slope)
    bytes_accessed = int(4 * (mpad * cw + 8 * cpad + 2 * mpad * cpad))
    return pl.pallas_call(
        kernel,
        grid=grid,
        in_specs=[pl.BlockSpec((tm, cw), lambda i: (i, 0)),
                  pl.BlockSpec((8, cpad), lambda i: (0, 0))],     # coefficients resident
        out_specs=(pl.BlockSpec((tm, cpad), lambda i: (i, 0)),
                   pl.BlockSpec((tm, cpad), lambda i: (i, 0))),
        out_shape=(jax.ShapeDtypeStruct((mpad, cpad), jnp.float32),
                   jax.ShapeDtypeStruct((mpad, cpad), jnp.float32)),
        compiler_params=pltpu.CompilerParams(
            dimension_semantics=("parallel",),                    # independent tiles
            vmem_limit_bytes=48 * 1024 * 1024),
        cost_estimate=pl.CostEstimate(flops=int(6 * mpad * cpad),
                                      transcendentals=0,
                                      bytes_accessed=bytes_accessed),
    )(c, coef)


# ---------------------------------------------------------------------------
# Decoder module (deterministic in-script parameter init)
# ---------------------------------------------------------------------------
class Decoder:
    def __init__(self, dconv_cfg, leaky_slope, key, *,
                 row_tile=512, matmul_dtype=jnp.float32):
        in_ch, out_ch, ksize, stride, padding = dconv_cfg
        self.in_ch, self.out_ch = in_ch, out_ch
        self.ksize, self.stride, self.padding = ksize, stride, padding
        self.slope = float(leaky_slope)
        self.eps = 1e-5
        self.row_tile = int(row_tile)
        self.matmul_dtype = matmul_dtype       # bf16 option for v6e/v7x (check tolerance)
        kh, kw = ksize
        k1, k2, k3 = jax.random.split(key, 3)
        bound = 1.0 / math.sqrt(in_ch * kh * kw)
        # ConvTranspose2d weights in PyTorch layout (Cin, Cout, kh, kw), bias=False.
        self.w_re = jax.random.uniform(k1, (in_ch, out_ch, kh, kw), jnp.float32,
                                       -bound, bound)
        self.w_im = jax.random.uniform(k2, (in_ch, out_ch, kh, kw), jnp.float32,
                                       -bound, bound)
        # ComplexBatchNorm affine params (Wrr=Wii=1, Wri~U(-.9,.9), B=0).
        self.Wrr = jnp.ones((1, out_ch), jnp.float32)
        self.Wii = jnp.ones((1, out_ch), jnp.float32)
        self.Wri = jax.random.uniform(k3, (1, out_ch), jnp.float32, -0.9, 0.9)
        self.Br = jnp.zeros((1, out_ch), jnp.float32)
        self.Bi = jnp.zeros((1, out_ch), jnp.float32)

    def _flatten_tconv_weight(self, w):
        # (Cin, Cout, kh, kw) -> equivalent stride-1 conv weight flattened to
        # (Cin*kh*kw, Cout), matching the im2col column ordering.
        kh, kw = self.ksize
        w_flipped = jnp.flip(w, axis=(2, 3))
        return w_flipped.transpose(0, 2, 3, 1).reshape(self.in_ch * kh * kw,
                                                       self.out_ch)

    def __call__(self, xr, xi, skip=None):
        if skip is not None:
            xr = padded_cat(xr, skip[0], dim=1)
            xi = padded_cat(xi, skip[1], dim=1)
        kh, kw = self.ksize
        ph, pw = self.padding
        eff = (kh - 1 - ph, kw - 1 - pw)
        pr, (n, ho, wo) = _im2col(_dilate_and_pad(xr, self.stride, eff), self.ksize)
        pi, _ = _im2col(_dilate_and_pad(xi, self.stride, eff), self.ksize)

        m, k = pr.shape
        cout = self.out_ch
        tm = min(self.row_tile, _round_up(m, 8))
        tm = _round_up(tm, 8)
        mpad = _round_up(m, tm)
        kpad = _round_up(2 * k, 128)
        cpad = _round_up(cout, 128)
        cw = 2 * cpad
        mdt = self.matmul_dtype

        # Fused LHS: [pr | pi], zero-padded to (Mpad, Kpad).
        p = jnp.zeros((mpad, kpad), mdt)
        p = p.at[:m, :k].set(pr.astype(mdt))
        p = p.at[:m, k:2 * k].set(pi.astype(mdt))

        # Fused weights: columns [0:Cout) -> cr, [Cpad:Cpad+Cout) -> ci.
        wre = self._flatten_tconv_weight(self.w_re)
        wim = self._flatten_tconv_weight(self.w_im)
        w = jnp.zeros((kpad, cw), mdt)
        w = w.at[:k, :cout].set(wre.astype(mdt))
        w = w.at[k:2 * k, :cout].set((-wim).astype(mdt))
        w = w.at[:k, cpad:cpad + cout].set(wim.astype(mdt))
        w = w.at[k:2 * k, cpad:cpad + cout].set(wre.astype(mdt))

        # Pass 1: conv-transpose matmul + global BN stat accumulation.
        c, stats = _run_conv_stats(p, w, tm)

        # BN affine params packed lane-dense (rows: Wrr, Wri, Wii, Br, Bi).
        params = jnp.zeros((8, cpad), jnp.float32)
        params = params.at[0, :cout].set(self.Wrr[0])
        params = params.at[1, :cout].set(self.Wri[0])
        params = params.at[2, :cout].set(self.Wii[0])
        params = params.at[3, :cout].set(self.Br[0])
        params = params.at[4, :cout].set(self.Bi[0])

        # Per-channel coefficients computed once (hoisted out of the tile loop).
        coef = _run_bn_coef(stats, params, inv_m=1.0 / float(m), eps=self.eps)

        # Pass 2: whitening + affine + CLeakyReLU, tiled over M, megacore-parallel.
        yr_flat, yi_flat = _run_bn_apply(c, coef, tm, self.slope)

        # TODO(synk): keep outputs NHWC downstream to avoid this transpose round trip;
        # NCHW is kept here to match the PyTorch module's public contract.
        yr = yr_flat[:m, :cout].reshape(n, ho, wo, cout).transpose(0, 3, 1, 2)
        yi = yi_flat[:m, :cout].reshape(n, ho, wo, cout).transpose(0, 3, 1, 2)
        return yr, yi


# ---------------------------------------------------------------------------
# pure-JAX reference for verification
# ---------------------------------------------------------------------------
def _reference(dec, xr, xi, skip):
    if skip is not None:
        xr = padded_cat(xr, skip[0], dim=1)
        xi = padded_cat(xi, skip[1], dim=1)
    kh, kw = dec.ksize
    ph, pw = dec.padding

    def tconv(x, w):
        w_conv = jnp.flip(w, axis=(2, 3)).transpose(1, 0, 2, 3)  # (Cout,Cin,kh,kw)
        return lax.conv_general_dilated(
            x, w_conv, window_strides=(1, 1),
            padding=[(kh - 1 - ph, kh - 1 - ph), (kw - 1 - pw, kw - 1 - pw)],
            lhs_dilation=dec.stride,
            dimension_numbers=('NCHW', 'OIHW', 'NCHW'),
            precision=lax.Precision.HIGHEST)

    cr = tconv(xr, dec.w_re) - tconv(xi, dec.w_im)
    ci = tconv(xi, dec.w_re) + tconv(xr, dec.w_im)

    red = (0, 2, 3)
    mr = jnp.mean(cr, axis=red, keepdims=True)
    mi = jnp.mean(ci, axis=red, keepdims=True)
    xr_, xi_ = cr - mr, ci - mi
    vrr = jnp.mean(xr_ * xr_, axis=red, keepdims=True) + dec.eps
    vri = jnp.mean(xr_ * xi_, axis=red, keepdims=True)
    vii = jnp.mean(xi_ * xi_, axis=red, keepdims=True) + dec.eps
    tau = vrr + vii
    delta = vrr * vii - vri * vri
    s = jnp.sqrt(delta)
    t = jnp.sqrt(tau + 2.0 * s)
    rst = 1.0 / (s * t)
    urr, uii, uri = (s + vii) * rst, (s + vrr) * rst, -vri * rst

    v = lambda a: a.reshape(1, -1, 1, 1)
    wrr, wri, wii = v(dec.Wrr), v(dec.Wri), v(dec.Wii)
    br, bi = v(dec.Br), v(dec.Bi)
    zrr = wrr * urr + wri * uri
    zri = wrr * uri + wri * uii
    zir = wri * urr + wii * uri
    zii = wri * uri + wii * uii
    yr = zrr * xr_ + zri * xi_ + br
    yi = zir * xr_ + zii * xi_ + bi
    lrelu = lambda a: jnp.where(a >= 0, a, dec.slope * a)
    return lrelu(yr), lrelu(yi)


if __name__ == "__main__":
    key = jax.random.PRNGKey(0)
    kp, kx = jax.random.split(key)

    # dconv_cfg = (in_channels_after_skip_cat, out_channels, kernel, stride, padding)
    dconv_cfg = (8, 4, (3, 3), (2, 1), (0, 0))
    # row_tile=128 forces several M tiles at this toy size so the two-pass
    # (accumulate stats / apply) path is exercised; use 512-2048 at real sizes.
    dec = Decoder(dconv_cfg, leaky_slope=0.1, key=kp, row_tile=128)

    k1, k2, k3, k4 = jax.random.split(kx, 4)
    xr = jax.random.normal(k1, (2, 4, 8, 8), jnp.float32)
    xi = jax.random.normal(k2, (2, 4, 8, 8), jnp.float32)
    skip = (jax.random.normal(k3, (2, 4, 9, 10), jnp.float32),
            jax.random.normal(k4, (2, 4, 9, 10), jnp.float32))

    yr, yi = dec(xr, xi, skip=skip)
    jax.block_until_ready((yr, yi))

    ryr, ryi = _reference(dec, xr, xi, skip)
    assert yr.shape == ryr.shape and yi.shape == ryi.shape
    assert jnp.allclose(yr, ryr, rtol=1e-3, atol=1e-3), "real part mismatch"
    assert jnp.allclose(yi, ryi, rtol=1e-3, atol=1e-3), "imag part mismatch"
    print("KERNEL_OK")
</pallas_src>

<mosaic_0001>
module attributes {stable_mosaic.version = 11 : i64} {
  func.func @_conv_stats_kernel(%arg0: i32, %arg1: memref<128x256xf32, #tpu.memory_space<vmem>>, %arg2: memref<256x256xf32, #tpu.memory_space<vmem>>, %arg3: memref<128x256xf32, #tpu.memory_space<vmem>>, %arg4: memref<8x256xf32, #tpu.memory_space<vmem>>) attributes {dimension_semantics = [#tpu.dimension_semantics<arbitrary>], iteration_bounds = array<i64: 4>, scalar_prefetch = 0 : i64, scratch_operands = 0 : i64, tpu.core_type = #tpu.core_type<tc>, window_params = [{transform_indices = @transform_0, window_bounds = array<i64: 128, 256>}, {pipeline_mode = #tpu.pipeline_mode<synchronous>, transform_indices = @transform_1, window_bounds = array<i64: 256, 256>}, {transform_indices = @transform_2, window_bounds = array<i64: 128, 256>}, {pipeline_mode = #tpu.pipeline_mode<synchronous>, transform_indices = @transform_3, window_bounds = array<i64: 8, 256>}]} {
    %c0 = arith.constant 0 : index
    %c0_0 = arith.constant 0 : index
    %0 = vector.load %arg1[%c0, %c0_0] : memref<128x256xf32, #tpu.memory_space<vmem>>, vector<128x256xf32>
    %c0_1 = arith.constant 0 : index
    %c0_2 = arith.constant 0 : index
    %1 = vector.load %arg2[%c0_1, %c0_2] : memref<256x256xf32, #tpu.memory_space<vmem>>, vector<256x256xf32>
    %cst = arith.constant dense<0.000000e+00> : vector<128x256xf32>
    %2 = tpu.matmul %0, %1, %cst {dimension_numbers = #tpu.dot_dimension_numbers<[1], [0], [0], [1], [0, 0, 1, 1], [], []>} : vector<128x256xf32>, vector<256x256xf32>, vector<128x256xf32> -> vector<128x256xf32>
    %c0_3 = arith.constant 0 : index
    %c0_4 = arith.constant 0 : index
    %3 = vector.load %arg3[%c0_3, %c0_4] : memref<128x256xf32, #tpu.memory_space<vmem>>, vector<128x256xf32>
    tpu.vector_store %arg3[%c0_3, %c0_4], %2 {strides = array<i32>} : memref<128x256xf32, #tpu.memory_space<vmem>>, vector<128x256xf32>,
    %cst_5 = arith.constant dense<0.000000e+00> : vector<256xf32>
    %4 = vector.multi_reduction <add>, %2, %cst_5 [0] : vector<128x256xf32> to vector<256xf32>
    %5 = vector.shape_cast %4 : vector<256xf32> to vector<1x256xf32>
    %6 = arith.mulf %2, %2 : vector<128x256xf32>
    %cst_6 = arith.constant dense<0.000000e+00> : vector<256xf32>
    %7 = vector.multi_reduction <add>, %6, %cst_6 [0] : vector<128x256xf32> to vector<256xf32>
    %8 = vector.shape_cast %7 : vector<256xf32> to vector<1x256xf32>
    %9 = vector.extract_strided_slice %2 {offsets = [0, 0], sizes = [128, 128], strides = [1, 1]} : vector<128x256xf32> to vector<128x128xf32>
    %10 = vector.extract_strided_slice %2 {offsets = [0, 128], sizes = [128, 128], strides = [1, 1]} : vector<128x256xf32> to vector<128x128xf32>
    %11 = arith.mulf %9, %10 : vector<128x128xf32>
    %cst_7 = arith.constant dense<0.000000e+00> : vector<128xf32>
    %12 = vector.multi_reduction <add>, %11, %cst_7 [0] : vector<128x128xf32> to vector<128xf32>
    %13 = vector.shape_cast %12 : vector<128xf32> to vector<1x128xf32>
    %c0_i32 = arith.constant 0 : i32
    %14 = arith.cmpi eq, %arg0, %c0_i32 : i32
    %15 = arith.extui %14 : i1 to i32
    %c0_i32_8 = arith.constant 0 : i32
    %16 = arith.cmpi ne, %15, %c0_i32_8 : i32
    scf.if %16 {
      %cst_19 = arith.constant 0.000000e+00 : f32
      %26 = vector.broadcast %cst_19 : f32 to vector<8x256xf32>
      %c0_20 = arith.constant 0 : index
      %c0_21 = arith.constant 0 : index
      %27 = vector.load %arg4[%c0_20, %c0_21] : memref<8x256xf32, #tpu.memory_space<vmem>>, vector<8x256xf32>
      tpu.vector_store %arg4[%c0_20, %c0_21], %26 {strides = array<i32>} : memref<8x256xf32, #tpu.memory_space<vmem>>, vector<8x256xf32>,
    } else {
    }
    %c0_9 = arith.constant 0 : index
    %c0_10 = arith.constant 0 : index
    %17 = vector.load %arg4[%c0_9, %c0_10] : memref<8x256xf32, #tpu.memory_space<vmem>>, vector<1x256xf32>
    %18 = arith.addf %17, %5 : vector<1x256xf32>
    %c0_11 = arith.constant 0 : index
    %c0_12 = arith.constant 0 : index
    %19 = vector.load %arg4[%c0_11, %c0_12] : memref<8x256xf32, #tpu.memory_space<vmem>>, vector<1x256xf32>
    tpu.vector_store %arg4[%c0_11, %c0_12], %18 {strides = array<i32>} : memref<8x256xf32, #tpu.memory_space<vmem>>, vector<1x256xf32>,
    %c1 = arith.constant 1 : index
    %c0_13 = arith.constant 0 : index
    %20 = vector.load %arg4[%c1, %c0_13] : memref<8x256xf32, #tpu.memory_space<vmem>>, vector<1x256xf32>
    %21 = arith.addf %20, %8 : vector<1x256xf32>
    %c1_14 = arith.constant 1 : index
    %c0_15 = arith.constant 0 : index
    %22 = vector.load %arg4[%c1_14, %c0_15] : memref<8x256xf32, #tpu.memory_space<vmem>>, vector<1x256xf32>
    tpu.vector_store %arg4[%c1_14, %c0_15], %21 {strides = array<i32>} : memref<8x256xf32, #tpu.memory_space<vmem>>, vector<1x256xf32>,
    %c2 = arith.constant 2 : index
    %c0_16 = arith.constant 0 : index
    %23 = vector.load %arg4[%c2, %c0_16] : memref<8x256xf32, #tpu.memory_space<vmem>>, vector<1x128xf32>
    %24 = arith.addf %23, %13 : vector<1x128xf32>
    %c2_17 = arith.constant 2 : index
    %c0_18 = arith.constant 0 : index
    %25 = vector.load %arg4[%c2_17, %c0_18] : memref<8x256xf32, #tpu.memory_space<vmem>>, vector<1x128xf32>
    tpu.vector_store %arg4[%c2_17, %c0_18], %24 {strides = array<i32>} : memref<8x256xf32, #tpu.memory_space<vmem>>, vector<1x128xf32>,
    return
  }
  func.func @transform_0(%arg0: i32) -> (i32, i32) {
    %c0_i32 = arith.constant 0 : i32
    %c0_i32_0 = arith.constant 0 : i32
    return %arg0, %c0_i32 : i32, i32
  }
  func.func @transform_1(%arg0: i32) -> (i32, i32) {
    %c0_i32 = arith.constant 0 : i32
    %c0_i32_0 = arith.constant 0 : i32
    %c0_i32_1 = arith.constant 0 : i32
    return %c0_i32, %c0_i32_0 : i32, i32
  }
  func.func @transform_2(%arg0: i32) -> (i32, i32) {
    %c0_i32 = arith.constant 0 : i32
    %c0_i32_0 = arith.constant 0 : i32
    return %arg0, %c0_i32 : i32, i32
  }
  func.func @transform_3(%arg0: i32) -> (i32, i32) {
    %c0_i32 = arith.constant 0 : i32
    %c0_i32_0 = arith.constant 0 : i32
    %c0_i32_1 = arith.constant 0 : i32
    return %c0_i32, %c0_i32_0 : i32, i32
  }
}

</mosaic_0001>

<llo_original>
// kernel: tpu_custom_call.1
$region0: #{tpu_custom_call.1}
  #allocation0 [shape = 'u32[]', space=smem, size = 0x4, offset = 0x4, fixed_abs, tag = 'smem constant byte address 0x4 - core index']
  #allocation1 [shape = 'u32[72,128]{1,0:T(1,128)}', space=vmem, size = 0x9000, scoped, tag = 'internal scratch']
  %s0 = inlined_call_operand.hbm [shape: f32[512,256], index: 0, kind: input, shape index: {}]
  %s1 = inlined_call_operand.hbm [shape: f32[256,256], index: 1, kind: input, shape index: {}]
  %s2 = inlined_call_operand.hbm [shape: f32[512,256], index: 2, kind: output, shape index: {0}]
  %s3 = inlined_call_operand.hbm [shape: f32[8,256], index: 3, kind: output, shape index: {1}]
  %4 = xla_tuple %s2, %s3
  %s5 = sld [smem:[#allocation0]]
  $region61: #{tpu_custom_call.1} parent=0
    _
  %s7 = ssub.s32 1, %s5
  %s8 = scalar_select 0, %s7, %s5
  $region1: #{tpu_custom_call.1} parent=0
    #allocation2 [shape = 'u8[262144]{0}', space=vmem, size = 0x40000, scoped, tag = 'input window, operand 0']
    #allocation3 [shape = 's32[2]{0}', space=sflag, size = 0x8, scoped, tag = 'scoped memory for tpu_custom_call.1']
    #allocation4 [shape = 's32[2]{0}', space=sflag, size = 0x8, scoped, tag = 'scoped memory for tpu_custom_call.1']
    #allocation5 [shape = 'u8[262144]{0}', space=vmem, size = 0x40000, scoped, tag = 'input window, operand 1, single buffered']
    #allocation6 [shape = 's32[1]{0}', space=sflag, size = 0x4, scoped, tag = 'scoped memory for tpu_custom_call.1']
    #allocation7 [shape = 'u8[262144]{0}', space=vmem, size = 0x40000, scoped, tag = 'output window, operand 0']
    #allocation8 [shape = 'u8[8192]{0}', space=vmem, size = 0x2000, scoped, tag = 'output window, operand 1, single buffered']
    #allocation9 [shape = 's32[1]{0}', space=sflag, size = 0x4, scoped, tag = 'scoped memory for tpu_custom_call.1']
    %9 = vsyncpa [#allocation3], 0
    %s10 = scalar_lea.sflag [#allocation3], 1
    %11 = vsyncpa %s10, 0
    %12 = vsyncpa [#allocation6], 0
    %13 = vsyncpa [#allocation4], 0
    %s14 = scalar_lea.sflag [#allocation4], 1
    %15 = vsyncpa %s14, 0
    %16 = vsyncpa [#allocation9], 0
    loop: start=0, step=1, limit=6
    $region2: #{tpu_custom_call.1} parent=1 // loop_pre_header
      _
    $region3: #{tpu_custom_call.1} parent=1 // loop_header
      %s18 = sphi 0, %s22
      %p19 = scmp.ge.s32.totalorder %s18, 6
      %s28 = sphi 0, %s30
      %s31 = sphi 0, %s28
      %s32 = sphi 0, %s31
      %s48 = sphi 0, %s32
      %s52 = sphi 0, %s52
      %s54 = sphi 0, %s52
      %s55 = sphi 0, %s54
      %s69 = sphi 0, %s55
      %s75 = sphi 0, %s77
      %s78 = sphi 0, %s75
      %s79 = sphi 0, %s78
      %s95 = sphi 0, %s79
      %s99 = sphi 0, %s99
      %s101 = sphi 0, %s99
      %s102 = sphi 0, %s101
      %s116 = sphi 0, %s102
    $region4: #{tpu_custom_call.1} parent=1 // loop_header_branch
      %21 = sbr.rel (%p19) target = $region8
    $region5: #{tpu_custom_call.1} parent=1 // loop_body
      %s23 = ssub.s32 %s18, 1
      %s24 = ssub.s32 %s18, 2
      %s25 = sadd.s32 %s18, 1
      %s26 = ssub.s32 %s18, %s25
      %p27 = scmp.eq.s32.totalorder %s26, 0
      %s29 = sadd.s32 %s28, 1
      %s30 = scalar_select %p27, %s28, %s29
      %p33 = pneg %p27
      %p34 = scmp.eq.s32.totalorder %s18, 3
      %p35 = por %p33, %p34
      %p36 = scmp.ne.s32.totalorder %s28, %s31
      %p37 = scmp.eq.s32.totalorder %s18, 0
      %p38 = por %p36, %p37
      %p39 = scmp.ne.s32.totalorder %s28, %s31
      %p40 = scmp.eq.s32.totalorder %s23, 3
      %p41 = por %p39, %p40
      %p42 = scmp.ne.s32.totalorder %s31, %s32
      %p43 = scmp.eq.s32.totalorder %s23, 0
      %p44 = por %p42, %p43
      %p45 = scmp.ne.s32.totalorder %s31, %s32
      %p46 = scmp.eq.s32.totalorder %s24, 3
      %p47 = por %p45, %p46
      %p49 = scmp.ne.s32.totalorder %s32, %s48
      %p50 = scmp.eq.s32.totalorder %s24, 0
      %p51 = por %p49, %p50
      %s53 = sadd.s32 %s52, 1
      %p56 = scmp.eq.s32.totalorder %s18, 3
      %p57 = scmp.ne.s32.totalorder %s52, %s54
      %p58 = scmp.eq.s32.totalorder %s18, 0
      %p59 = por %p57, %p58
      %p60 = scmp.ne.s32.totalorder %s52, %s54
      %p61 = scmp.eq.s32.totalorder %s23, 3
      %p62 = por %p60, %p61
      %p63 = scmp.ne.s32.totalorder %s54, %s55
      %p64 = scmp.eq.s32.totalorder %s23, 0
      %p65 = por %p63, %p64
      %p66 = scmp.ne.s32.totalorder %s54, %s55
      %p67 = scmp.eq.s32.totalorder %s24, 3
      %p68 = por %p66, %p67
      %p70 = scmp.ne.s32.totalorder %s55, %s69
      %p71 = scmp.eq.s32.totalorder %s24, 0
      %p72 = por %p70, %p71
      %s73 = ssub.s32 %s18, %s25
      %p74 = scmp.eq.s32.totalorder %s73, 0
      %s76 = sadd.s32 %s75, 1
      %s77 = scalar_select %p74, %s75, %s76
      %p80 = pneg %p74
      %p81 = scmp.eq.s32.totalorder %s18, 3
      %p82 = por %p80, %p81
      %p83 = scmp.ne.s32.totalorder %s75, %s78
      %p84 = scmp.eq.s32.totalorder %s18, 0
      %p85 = por %p83, %p84
      %p86 = scmp.ne.s32.totalorder %s75, %s78
      %p87 = scmp.eq.s32.totalorder %s23, 3
      %p88 = por %p86, %p87
      %p89 = scmp.ne.s32.totalorder %s78, %s79
      %p90 = scmp.eq.s32.totalorder %s23, 0
      %p91 = por %p89, %p90
      %p92 = scmp.ne.s32.totalorder %s78, %s79
      %p93 = scmp.eq.s32.totalorder %s24, 3
      %p94 = por %p92, %p93
      %p96 = scmp.ne.s32.totalorder %s79, %s95
      %p97 = scmp.eq.s32.totalorder %s24, 0
      %p98 = por %p96, %p97
      %s100 = sadd.s32 %s99, 1
      %p103 = scmp.eq.s32.totalorder %s18, 3
      %p104 = scmp.ne.s32.totalorder %s99, %s101
      %p105 = scmp.eq.s32.totalorder %s18, 0
      %p106 = por %p104, %p105
      %p107 = scmp.ne.s32.totalorder %s99, %s101
      %p108 = scmp.eq.s32.totalorder %s23, 3
      %p109 = por %p107, %p108
      %p110 = scmp.ne.s32.totalorder %s101, %s102
      %p111 = scmp.eq.s32.totalorder %s23, 0
      %p112 = por %p110, %p111
      %p113 = scmp.ne.s32.totalorder %s101, %s102
      %p114 = scmp.eq.s32.totalorder %s24, 3
      %p115 = por %p113, %p114
      %p117 = scmp.ne.s32.totalorder %s102, %s116
      %p118 = scmp.eq.s32.totalorder %s24, 0
      %p119 = por %p117, %p118
      %p120 = scmp.le.s32.totalorder 1, %s18
      %p121 = scmp.lt.s32.totalorder %s18, 5
      %p122 = pnand %p120, %p121
      %p123 = pneg %p122
      // Predicated region
      $region9: #{tpu_custom_call.1} parent=5 // pred_check
        _
      $region10: #{tpu_custom_call.1} parent=5 // pred_check_branch
        %125 = sbr.rel (%p122) target = $region12
      $region11: #{tpu_custom_call.1} parent=5 // pred_region
        %s126 = ssub.s32 %s18, 1
        // Predicated region
        $region13: #{tpu_custom_call.1} parent=11 // pred_check
          %p127 = pneg %p65
        $region14: #{tpu_custom_call.1} parent=11 // pred_check_branch
          %129 = sbr.rel (%p127) target = $region16
        $region15: #{tpu_custom_call.1} parent=11 // pred_region
          %131 = vsyncadd [#allocation6], 0
          %s132 = sshll.u32 %s1, 4
          %s133 = int_to_ptr.hbm [resolvable:$true] %s132
          %s134 = sshll.u32 [#allocation5], 4
          %s135 = int_to_ptr.vmem [resolvable:$true] %s134
          %140 = dma.hbm_to_vmem [thread:$0]  %s133, 8192, %s135, [#allocation6], 256, 256, 16
        $region16: #{tpu_custom_call.1} parent=11 // pred_fallthru
          _
      $region12: #{tpu_custom_call.1} parent=5 // pred_fallthru
        _
      %p141 = scmp.lt.s32.totalorder %s18, 4
      // Predicated region
      $region17: #{tpu_custom_call.1} parent=5 // pred_check
        %p142 = pneg %p141
      $region18: #{tpu_custom_call.1} parent=5 // pred_check_branch
        %144 = sbr.rel (%p142) target = $region20
      $region19: #{tpu_custom_call.1} parent=5 // pred_region
        // Predicated region
        $region21: #{tpu_custom_call.1} parent=19 // pred_check
          %p145 = pneg %p38
        $region22: #{tpu_custom_call.1} parent=19 // pred_check_branch
          %147 = sbr.rel (%p145) target = $region24
        $region23: #{tpu_custom_call.1} parent=19 // pred_region
          %s148 = sand.u32 %s28, 1
          %s149 = scalar_lea.sflag [#allocation3], %s148
          %s150 = sand.u32 %s28, 1
          %s151 = smul.addr %s150, 256
          %s152 = scalar_lea.vmem [#allocation2], %s151
          %s153 = smul.u32 16, %s18
          %155 = vsyncadd %s149, 0
          %s156 = smul.addr %s153, 2
          %s157 = smul.addr %s156, 8
          %s158 = scalar_lea.hbm %s0, %s157
          %s159 = sshll.u32 %s158, 4
          %s160 = int_to_ptr.hbm [resolvable:$true] %s159
          %s161 = sshll.u32 %s152, 4
          %s162 = int_to_ptr.vmem [resolvable:$true] %s161
          %167 = dma.hbm_to_vmem [thread:$0]  %s160, 4096, %s162, %s149, 256, 256, 16
        $region24: #{tpu_custom_call.1} parent=19 // pred_fallthru
          _
      $region20: #{tpu_custom_call.1} parent=5 // pred_fallthru
        _
      %p168 = scmp.le.s32.totalorder 1, %s18
      %p169 = scmp.lt.s32.totalorder %s18, 5
      %p170 = pnand %p168, %p169
      %p171 = pneg %p170
      // Predicated region
      $region25: #{tpu_custom_call.1} parent=5 // pred_check
        _
      $region26: #{tpu_custom_call.1} parent=5 // pred_check_branch
        %173 = sbr.rel (%p170) target = $region28
      $region27: #{tpu_custom_call.1} parent=5 // pred_region
        %s174 = ssub.s32 %s18, 1
        %s175 = sand.u32 %s31, 1
        %s176 = scalar_lea.sflag [#allocation3], %s175
        %s177 = sand.u32 %s31, 1
        %s178 = smul.addr %s177, 256
        %s179 = scalar_lea.vmem [#allocation2], %s178
        // Predicated region
        $region29: #{tpu_custom_call.1} parent=27 // pred_check
          %p180 = pneg %p44
        $region30: #{tpu_custom_call.1} parent=27 // pred_check_branch
          %182 = sbr.rel (%p180) target = $region32
        $region31: #{tpu_custom_call.1} parent=27 // pred_region
          %184 = dma.done %s176, 4096
        $region32: #{tpu_custom_call.1} parent=27 // pred_fallthru
          _
        // Predicated region
        $region33: #{tpu_custom_call.1} parent=27 // pred_check
          %p185 = pneg %p65
        $region34: #{tpu_custom_call.1} parent=27 // pred_check_branch
          %187 = sbr.rel (%p185) target = $region36
        $region35: #{tpu_custom_call.1} parent=27 // pred_region
          %189 = dma.done [#allocation6], 8192
        $region36: #{tpu_custom_call.1} parent=27 // pred_fallthru
          _
        %s190 = sand.u32 %s31, 1
        %s191 = scalar_lea.sflag [#allocation3], %s190
        %s192 = sand.u32 %s31, 1
        %s193 = smul.addr %s192, 256
        %s194 = scalar_lea.vmem [#allocation2], %s193
        %p195 = pneg %p44
        %p196 = pneg %p41
        %p197 = pneg %p65
        %p198 = pneg %p62
        %p199 = pneg %p91
        %p200 = pneg %p88
        %s201 = sand.u32 %s78, 1
        %s202 = scalar_lea.sflag [#allocation4], %s201
        %s203 = sand.u32 %s78, 1
        %s204 = smul.addr %s203, 256
        %s205 = scalar_lea.vmem [#allocation7], %s204
        %p206 = pneg %p112
        %p207 = pneg %p109
        %s208 = smul.u32 16, %s23
        %s209 = smul.u32 16, %s23
        %v210 = vld [vmem:[%s179] sm:$0xff]
        %v211 = vld [vmem:[%s179 + $0x8] sm:$0xff]
        %v212 = vld [vmem:[%s179 + $0x10] sm:$0xff]
        %v213 = vld [vmem:[%s179 + $0x18] sm:$0xff]
        %v214 = vld [vmem:[%s179 + $0x20] sm:$0xff]
        %v215 = vld [vmem:[%s179 + $0x28] sm:$0xff]
        %v216 = vld [vmem:[%s179 + $0x30] sm:$0xff]
        %v217 = vld [vmem:[%s179 + $0x38] sm:$0xff]
        %v218 = vld [vmem:[%s179 + $0x40] sm:$0xff]
        %v219 = vld [vmem:[%s179 + $0x48] sm:$0xff]
        %v220 = vld [vmem:[%s179 + $0x50] sm:$0xff]
        %v221 = vld [vmem:[%s179 + $0x58] sm:$0xff]
        %v222 = vld [vmem:[%s179 + $0x60] sm:$0xff]
        %v223 = vld [vmem:[%s179 + $0x68] sm:$0xff]
        %v224 = vld [vmem:[%s179 + $0x70] sm:$0xff]
        %v225 = vld [vmem:[%s179 + $0x78] sm:$0xff]
        %v226 = vld [vmem:[%s179 + $0x80] sm:$0xff]
        %v227 = vld [vmem:[%s179 + $0x88] sm:$0xff]
        %v228 = vld [vmem:[%s179 + $0x90] sm:$0xff]
        %v229 = vld [vmem:[%s179 + $0x98] sm:$0xff]
        %v230 = vld [vmem:[%s179 + $0xa0] sm:$0xff]
        %v231 = vld [vmem:[%s179 + $0xa8] sm:$0xff]
        %v232 = vld [vmem:[%s179 + $0xb0] sm:$0xff]
        %v233 = vld [vmem:[%s179 + $0xb8] sm:$0xff]
        %v234 = vld [vmem:[%s179 + $0xc0] sm:$0xff]
        %v235 = vld [vmem:[%s179 + $0xc8] sm:$0xff]
        %v236 = vld [vmem:[%s179 + $0xd0] sm:$0xff]
        %v237 = vld [vmem:[%s179 + $0xd8] sm:$0xff]
        %v238 = vld [vmem:[%s179 + $0xe0] sm:$0xff]
        %v239 = vld [vmem:[%s179 + $0xe8] sm:$0xff]
        %v240 = vld [vmem:[%s179 + $0xf0] sm:$0xff]
        %v241 = vld [vmem:[%s179 + $0xf8] sm:$0xff]
        %v242 = vld [vmem:[#allocation5] sm:$0xff]
        %v243 = vld [vmem:[#allocation5 + $0x8] sm:$0xff]
        %v244 = vld [vmem:[#allocation5 + $0x10] sm:$0xff]
        %v245 = vld [vmem:[#allocation5 + $0x18] sm:$0xff]
        %v246 = vld [vmem:[#allocation5 + $0x20] sm:$0xff]
        %v247 = vld [vmem:[#allocation5 + $0x28] sm:$0xff]
        %v248 = vld [vmem:[#allocation5 + $0x30] sm:$0xff]
        %v249 = vld [vmem:[#allocation5 + $0x38] sm:$0xff]
        %v250 = vld [vmem:[#allocation5 + $0x40] sm:$0xff]
        %v251 = vld [vmem:[#allocation5 + $0x48] sm:$0xff]
        %v252 = vld [vmem:[#allocation5 + $0x50] sm:$0xff]
        %v253 = vld [vmem:[#allocation5 + $0x58] sm:$0xff]
        %v254 = vld [vmem:[#allocation5 + $0x60] sm:$0xff]
        %v255 = vld [vmem:[#allocation5 + $0x68] sm:$0xff]
        %v256 = vld [vmem:[#allocation5 + $0x70] sm:$0xff]
        %v257 = vld [vmem:[#allocation5 + $0x78] sm:$0xff]
        %v258 = vld [vmem:[#allocation5 + $0x80] sm:$0xff]
        %v259 = vld [vmem:[#allocation5 + $0x88] sm:$0xff]
        %v260 = vld [vmem:[#allocation5 + $0x90] sm:$0xff]
        %v261 = vld [vmem:[#allocation5 + $0x98] sm:$0xff]
        %v262 = vld [vmem:[#allocation5 + $0xa0] sm:$0xff]
        %v263 = vld [vmem:[#allocation5 + $0xa8] sm:$0xff]
        %v264 = vld [vmem:[#allocation5 + $0xb0] sm:$0xff]
        %v265 = vld [vmem:[#allocation5 + $0xb8] sm:$0xff]
        %v266 = vld [vmem:[#allocation5 + $0xc0] sm:$0xff]
        %v267 = vld [vmem:[#allocation5 + $0xc8] sm:$0xff]
        %v268 = vld [vmem:[#allocation5 + $0xd0] sm:$0xff]
        %v269 = vld [vmem:[#allocation5 + $0xd8] sm:$0xff]
        %v270 = vld [vmem:[#allocation5 + $0xe0] sm:$0xff]
        %v271 = vld [vmem:[#allocation5 + $0xe8] sm:$0xff]
        %v272 = vld [vmem:[#allocation5 + $0xf0] sm:$0xff]
        %v273 = vld [vmem:[#allocation5 + $0xf8] sm:$0xff]
        %v274 = vld [vmem:[#allocation5 + $0x100] sm:$0xff]
        %v275 = vld [vmem:[#allocation5 + $0x108] sm:$0xff]
        %v276 = vld [vmem:[#allocation5 + $0x110] sm:$0xff]
        %v277 = vld [vmem:[#allocation5 + $0x118] sm:$0xff]
        %v278 = vld [vmem:[#allocation5 + $0x120] sm:$0xff]
        %v279 = vld [vmem:[#allocation5 + $0x128] sm:$0xff]
        %v280 = vld [vmem:[#allocation5 + $0x130] sm:$0xff]
        %v281 = vld [vmem:[#allocation5 + $0x138] sm:$0xff]
        %v282 = vld [vmem:[#allocation5 + $0x140] sm:$0xff]
        %v283 = vld [vmem:[#allocation5 + $0x148] sm:$0xff]
        %v284 = vld [vmem:[#allocation5 + $0x150] sm:$0xff]
        %v285 = vld [vmem:[#allocation5 + $0x158] sm:$0xff]
        %v286 = vld [vmem:[#allocation5 + $0x160] sm:$0xff]
        %v287 = vld [vmem:[#allocation5 + $0x168] sm:$0xff]
        %v288 = vld [vmem:[#allocation5 + $0x170] sm:$0xff]
        %v289 = vld [vmem:[#allocation5 + $0x178] sm:$0xff]
        %v290 = vld [vmem:[#allocation5 + $0x180] sm:$0xff]
        %v291 = vld [vmem:[#allocation5 + $0x188] sm:$0xff]
        %v292 = vld [vmem:[#allocation5 + $0x190] sm:$0xff]
        %v293 = vld [vmem:[#allocation5 + $0x198] sm:$0xff]
        %v294 = vld [vmem:[#allocation5 + $0x1a0] sm:$0xff]
        %v295 = vld [vmem:[#allocation5 + $0x1a8] sm:$0xff]
        %v296 = vld [vmem:[#allocation5 + $0x1b0] sm:$0xff]
        %v297 = vld [vmem:[#allocation5 + $0x1b8] sm:$0xff]
        %v298 = vld [vmem:[#allocation5 + $0x1c0] sm:$0xff]
        %v299 = vld [vmem:[#allocation5 + $0x1c8] sm:$0xff]
        %v300 = vld [vmem:[#allocation5 + $0x1d0] sm:$0xff]
        %v301 = vld [vmem:[#allocation5 + $0x1d8] sm:$0xff]
        %v302 = vld [vmem:[#allocation5 + $0x1e0] sm:$0xff]
        %v303 = vld [vmem:[#allocation5 + $0x1e8] sm:$0xff]
        %v304 = vld [vmem:[#allocation5 + $0x1f0] sm:$0xff]
        %v305 = vld [vmem:[#allocation5 + $0x1f8] sm:$0xff]
        %306 = vmatpush.msra.mxu0 %v272
        %307 = vmatpush.msra.mxu0 %v270
        %308 = vmatpush.msra.mxu0 %v268
        %309 = vmatpush.msra.mxu0 %v266
        %310 = vmatpush.msra.mxu0 %v264
        %311 = vmatpush.msra.mxu0 %v262
        %312 = vmatpush.msra.mxu0 %v260
        %313 = vmatpush.msra.mxu0 %v258
        %314 = vmatpush.msra.mxu0 %v256
        %315 = vmatpush.msra.mxu0 %v254
        %316 = vmatpush.msra.mxu0 %v252
        %317 = vmatpush.msra.mxu0 %v250
        %318 = vmatpush.msra.mxu0 %v248
        %319 = vmatpush.msra.mxu0 %v246
        %320 = vmatpush.msra.mxu0 %v244
        %321 = vmatpush.msra.mxu0 %v242
        %322 = vmatmul.f32.gmra.mxu0 %v210
        %v323 = vpop.f32.mrf.mxu0
        %v324 = vadd.f32 0.0, %v323
        %325 = vmatmul.f32.gmra.mxu0 %v212
        %v326 = vpop.f32.mrf.mxu0
        %v327 = vadd.f32 0.0, %v326
        %328 = vmatmul.f32.gmra.mxu0 %v214
        %v329 = vpop.f32.mrf.mxu0
        %v330 = vadd.f32 0.0, %v329
        %331 = vmatmul.f32.gmra.mxu0 %v216
        %v332 = vpop.f32.mrf.mxu0
        %v333 = vadd.f32 0.0, %v332
        %334 = vmatmul.f32.gmra.mxu0 %v218
        %v335 = vpop.f32.mrf.mxu0
        %v336 = vadd.f32 0.0, %v335
        %337 = vmatmul.f32.gmra.mxu0 %v220
        %v338 = vpop.f32.mrf.mxu0
        %v339 = vadd.f32 0.0, %v338
        %340 = vmatmul.f32.gmra.mxu0 %v222
        %v341 = vpop.f32.mrf.mxu0
        %v342 = vadd.f32 0.0, %v341
        %343 = vmatmul.f32.gmra.mxu0 %v224
        %v344 = vpop.f32.mrf.mxu0
        %v345 = vadd.f32 0.0, %v344
        %346 = vmatmul.f32.gmra.mxu0 %v226
        %v347 = vpop.f32.mrf.mxu0
        %v348 = vadd.f32 0.0, %v347
        %349 = vmatmul.f32.gmra.mxu0 %v228
        %v350 = vpop.f32.mrf.mxu0
        %v351 = vadd.f32 0.0, %v350
        %352 = vmatmul.f32.gmra.mxu0 %v230
        %v353 = vpop.f32.mrf.mxu0
        %v354 = vadd.f32 0.0, %v353
        %355 = vmatmul.f32.gmra.mxu0 %v232
        %v356 = vpop.f32.mrf.mxu0
        %v357 = vadd.f32 0.0, %v356
        %358 = vmatmul.f32.gmra.mxu0 %v234
        %v359 = vpop.f32.mrf.mxu0
        %v360 = vadd.f32 0.0, %v359
        %361 = vmatmul.f32.gmra.mxu0 %v236
        %v362 = vpop.f32.mrf.mxu0
        %v363 = vadd.f32 0.0, %v362
        %364 = vmatmul.f32.gmra.mxu0 %v238
        %v365 = vpop.f32.mrf.mxu0
        %v366 = vadd.f32 0.0, %v365
        %367 = vmatmul.f32.gmra.mxu0 %v240
        %v368 = vpop.f32.mrf.mxu0
        %v369 = vadd.f32 0.0, %v368
        %370 = vdwg.mxu0
        %371 = vmatpush.msra.mxu0 %v304
        %372 = vmatpush.msra.mxu0 %v302
        %373 = vmatpush.msra.mxu0 %v300
        %374 = vmatpush.msra.mxu0 %v298
        %375 = vmatpush.msra.mxu0 %v296
        %376 = vmatpush.msra.mxu0 %v294
        %377 = vmatpush.msra.mxu0 %v292
        %378 = vmatpush.msra.mxu0 %v290
        %379 = vmatpush.msra.mxu0 %v288
        %380 = vmatpush.msra.mxu0 %v286
        %381 = vmatpush.msra.mxu0 %v284
        %382 = vmatpush.msra.mxu0 %v282
        %383 = vmatpush.msra.mxu0 %v280
        %384 = vmatpush.msra.mxu0 %v278
        %385 = vmatpush.msra.mxu0 %v276
        %386 = vmatpush.msra.mxu0 %v274
        %387 = vmatmul.f32.gmra.mxu0 %v211
        %v388 = vpop.f32.mrf.mxu0
        %v389 = vadd.f32 %v324, %v388
        %390 = vmatmul.f32.gmra.mxu0 %v213
        %v391 = vpop.f32.mrf.mxu0
        %v392 = vadd.f32 %v327, %v391
        %393 = vmatmul.f32.gmra.mxu0 %v215
        %v394 = vpop.f32.mrf.mxu0
        %v395 = vadd.f32 %v330, %v394
        %396 = vmatmul.f32.gmra.mxu0 %v217
        %v397 = vpop.f32.mrf.mxu0
        %v398 = vadd.f32 %v333, %v397
        %399 = vmatmul.f32.gmra.mxu0 %v219
        %v400 = vpop.f32.mrf.mxu0
        %v401 = vadd.f32 %v336, %v400
        %402 = vmatmul.f32.gmra.mxu0 %v221
        %v403 = vpop.f32.mrf.mxu0
        %v404 = vadd.f32 %v339, %v403
        %405 = vmatmul.f32.gmra.mxu0 %v223
        %v406 = vpop.f32.mrf.mxu0
        %v407 = vadd.f32 %v342, %v406
        %408 = vmatmul.f32.gmra.mxu0 %v225
        %v409 = vpop.f32.mrf.mxu0
        %v410 = vadd.f32 %v345, %v409
        %411 = vmatmul.f32.gmra.mxu0 %v227
        %v412 = vpop.f32.mrf.mxu0
        %v413 = vadd.f32 %v348, %v412
        %414 = vmatmul.f32.gmra.mxu0 %v229
        %v415 = vpop.f32.mrf.mxu0
        %v416 = vadd.f32 %v351, %v415
        %417 = vmatmul.f32.gmra.mxu0 %v231
        %v418 = vpop.f32.mrf.mxu0
        %v419 = vadd.f32 %v354, %v418
        %420 = vmatmul.f32.gmra.mxu0 %v233
        %v421 = vpop.f32.mrf.mxu0
        %v422 = vadd.f32 %v357, %v421
        %423 = vmatmul.f32.gmra.mxu0 %v235
        %v424 = vpop.f32.mrf.mxu0
        %v425 = vadd.f32 %v360, %v424
        %426 = vmatmul.f32.gmra.mxu0 %v237
        %v427 = vpop.f32.mrf.mxu0
        %v428 = vadd.f32 %v363, %v427
        %429 = vmatmul.f32.gmra.mxu0 %v239
        %v430 = vpop.f32.mrf.mxu0
        %v431 = vadd.f32 %v366, %v430
        %432 = vmatmul.f32.gmra.mxu0 %v241
        %v433 = vpop.f32.mrf.mxu0
        %v434 = vadd.f32 %v369, %v433
        %435 = vdwg.mxu0
        %436 = vmatpush.msra.mxu0 %v273
        %437 = vmatpush.msra.mxu0 %v271
        %438 = vmatpush.msra.mxu0 %v269
        %439 = vmatpush.msra.mxu0 %v267
        %440 = vmatpush.msra.mxu0 %v265
        %441 = vmatpush.msra.mxu0 %v263
        %442 = vmatpush.msra.mxu0 %v261
        %443 = vmatpush.msra.mxu0 %v259
        %444 = vmatpush.msra.mxu0 %v257
        %445 = vmatpush.msra.mxu0 %v255
        %446 = vmatpush.msra.mxu0 %v253
        %447 = vmatpush.msra.mxu0 %v251
        %448 = vmatpush.msra.mxu0 %v249
        %449 = vmatpush.msra.mxu0 %v247
        %450 = vmatpush.msra.mxu0 %v245
        %451 = vmatpush.msra.mxu0 %v243
        %452 = vmatmul.f32.gmra.mxu0 %v210
        %v453 = vpop.f32.mrf.mxu0
        %v454 = vadd.f32 0.0, %v453
        %455 = vmatmul.f32.gmra.mxu0 %v212
        %v456 = vpop.f32.mrf.mxu0
        %v457 = vadd.f32 0.0, %v456
        %458 = vmatmul.f32.gmra.mxu0 %v214
        %v459 = vpop.f32.mrf.mxu0
        %v460 = vadd.f32 0.0, %v459
        %461 = vmatmul.f32.gmra.mxu0 %v216
        %v462 = vpop.f32.mrf.mxu0
        %v463 = vadd.f32 0.0, %v462
        %464 = vmatmul.f32.gmra.mxu0 %v218
        %v465 = vpop.f32.mrf.mxu0
        %v466 = vadd.f32 0.0, %v465
        %467 = vmatmul.f32.gmra.mxu0 %v220
        %v468 = vpop.f32.mrf.mxu0
        %v469 = vadd.f32 0.0, %v468
        %470 = vmatmul.f32.gmra.mxu0 %v222
        %v471 = vpop.f32.mrf.mxu0
        %v472 = vadd.f32 0.0, %v471
        %473 = vmatmul.f32.gmra.mxu0 %v224
        %v474 = vpop.f32.mrf.mxu0
        %v475 = vadd.f32 0.0, %v474
        %476 = vmatmul.f32.gmra.mxu0 %v226
        %v477 = vpop.f32.mrf.mxu0
        %v478 = vadd.f32 0.0, %v477
        %479 = vmatmul.f32.gmra.mxu0 %v228
        %v480 = vpop.f32.mrf.mxu0
        %v481 = vadd.f32 0.0, %v480
        %482 = vmatmul.f32.gmra.mxu0 %v230
        %v483 = vpop.f32.mrf.mxu0
        %v484 = vadd.f32 0.0, %v483
        %485 = vmatmul.f32.gmra.mxu0 %v232
        %v486 = vpop.f32.mrf.mxu0
        %v487 = vadd.f32 0.0, %v486
        %488 = vmatmul.f32.gmra.mxu0 %v234
        %v489 = vpop.f32.mrf.mxu0
        %v490 = vadd.f32 0.0, %v489
        %491 = vmatmul.f32.gmra.mxu0 %v236
        %v492 = vpop.f32.mrf.mxu0
        %v493 = vadd.f32 0.0, %v492
        %494 = vmatmul.f32.gmra.mxu0 %v238
        %v495 = vpop.f32.mrf.mxu0
        %v496 = vadd.f32 0.0, %v495
        %497 = vmatmul.f32.gmra.mxu0 %v240
        %v498 = vpop.f32.mrf.mxu0
        %v499 = vadd.f32 0.0, %v498
        %500 = vdwg.mxu0
        %501 = vmatpush.msra.mxu0 %v305
        %502 = vmatpush.msra.mxu0 %v303
        %503 = vmatpush.msra.mxu0 %v301
        %504 = vmatpush.msra.mxu0 %v299
        %505 = vmatpush.msra.mxu0 %v297
        %506 = vmatpush.msra.mxu0 %v295
        %507 = vmatpush.msra.mxu0 %v293
        %508 = vmatpush.msra.mxu0 %v291
        %509 = vmatpush.msra.mxu0 %v289
        %510 = vmatpush.msra.mxu0 %v287
        %511 = vmatpush.msra.mxu0 %v285
        %512 = vmatpush.msra.mxu0 %v283
        %513 = vmatpush.msra.mxu0 %v281
        %514 = vmatpush.msra.mxu0 %v279
        %515 = vmatpush.msra.mxu0 %v277
        %516 = vmatpush.msra.mxu0 %v275
        %517 = vmatmul.f32.gmra.mxu0 %v211
        %v518 = vpop.f32.mrf.mxu0
        %v519 = vadd.f32 %v454, %v518
        %520 = vmatmul.f32.gmra.mxu0 %v213
        %v521 = vpop.f32.mrf.mxu0
        %v522 = vadd.f32 %v457, %v521
        %523 = vmatmul.f32.gmra.mxu0 %v215
        %v524 = vpop.f32.mrf.mxu0
        %v525 = vadd.f32 %v460, %v524
        %526 = vmatmul.f32.gmra.mxu0 %v217
        %v527 = vpop.f32.mrf.mxu0
        %v528 = vadd.f32 %v463, %v527
        %529 = vmatmul.f32.gmra.mxu0 %v219
        %v530 = vpop.f32.mrf.mxu0
        %v531 = vadd.f32 %v466, %v530
        %532 = vmatmul.f32.gmra.mxu0 %v221
        %v533 = vpop.f32.mrf.mxu0
        %v534 = vadd.f32 %v469, %v533
        %535 = vmatmul.f32.gmra.mxu0 %v223
        %v536 = vpop.f32.mrf.mxu0
        %v537 = vadd.f32 %v472, %v536
        %538 = vmatmul.f32.gmra.mxu0 %v225
        %v539 = vpop.f32.mrf.mxu0
        %v540 = vadd.f32 %v475, %v539
        %541 = vmatmul.f32.gmra.mxu0 %v227
        %v542 = vpop.f32.mrf.mxu0
        %v543 = vadd.f32 %v478, %v542
        %544 = vmatmul.f32.gmra.mxu0 %v229
        %v545 = vpop.f32.mrf.mxu0
        %v546 = vadd.f32 %v481, %v545
        %547 = vmatmul.f32.gmra.mxu0 %v231
        %v548 = vpop.f32.mrf.mxu0
        %v549 = vadd.f32 %v484, %v548
        %550 = vmatmul.f32.gmra.mxu0 %v233
        %v551 = vpop.f32.mrf.mxu0
        %v552 = vadd.f32 %v487, %v551
        %553 = vmatmul.f32.gmra.mxu0 %v235
        %v554 = vpop.f32.mrf.mxu0
        %v555 = vadd.f32 %v490, %v554
        %556 = vmatmul.f32.gmra.mxu0 %v237
        %v557 = vpop.f32.mrf.mxu0
        %v558 = vadd.f32 %v493, %v557
        %559 = vmatmul.f32.gmra.mxu0 %v239
        %v560 = vpop.f32.mrf.mxu0
        %v561 = vadd.f32 %v496, %v560
        %562 = vmatmul.f32.gmra.mxu0 %v241
        %v563 = vpop.f32.mrf.mxu0
        %v564 = vadd.f32 %v499, %v563
        %565 = vdwg.mxu0
        %566 = vst [vmem:[%s205] sm:$0xff] %v389
        %567 = vst [vmem:[%s205 + $0x8] sm:$0xff] %v519
        %568 = vst [vmem:[%s205 + $0x10] sm:$0xff] %v392
        %569 = vst [vmem:[%s205 + $0x18] sm:$0xff] %v522
        %570 = vst [vmem:[%s205 + $0x20] sm:$0xff] %v395
        %571 = vst [vmem:[%s205 + $0x28] sm:$0xff] %v525
        %572 = vst [vmem:[%s205 + $0x30] sm:$0xff] %v398
        %573 = vst [vmem:[%s205 + $0x38] sm:$0xff] %v528
        %574 = vst [vmem:[%s205 + $0x40] sm:$0xff] %v401
        %575 = vst [vmem:[%s205 + $0x48] sm:$0xff] %v531
        %576 = vst [vmem:[%s205 + $0x50] sm:$0xff] %v404
        %577 = vst [vmem:[%s205 + $0x58] sm:$0xff] %v534
        %578 = vst [vmem:[%s205 + $0x60] sm:$0xff] %v407
        %579 = vst [vmem:[%s205 + $0x68] sm:$0xff] %v537
        %580 = vst [vmem:[%s205 + $0x70] sm:$0xff] %v410
        %581 = vst [vmem:[%s205 + $0x78] sm:$0xff] %v540
        %582 = vst [vmem:[%s205 + $0x80] sm:$0xff] %v413
        %583 = vst [vmem:[%s205 + $0x88] sm:$0xff] %v543
        %584 = vst [vmem:[%s205 + $0x90] sm:$0xff] %v416
        %585 = vst [vmem:[%s205 + $0x98] sm:$0xff] %v546
        %586 = vst [vmem:[%s205 + $0xa0] sm:$0xff] %v419
        %587 = vst [vmem:[%s205 + $0xa8] sm:$0xff] %v549
        %588 = vst [vmem:[%s205 + $0xb0] sm:$0xff] %v422
        %589 = vst [vmem:[%s205 + $0xb8] sm:$0xff] %v552
        %590 = vst [vmem:[%s205 + $0xc0] sm:$0xff] %v425
        %591 = vst [vmem:[%s205 + $0xc8] sm:$0xff] %v555
        %592 = vst [vmem:[%s205 + $0xd0] sm:$0xff] %v428
        %593 = vst [vmem:[%s205 + $0xd8] sm:$0xff] %v558
        %594 = vst [vmem:[%s205 + $0xe0] sm:$0xff] %v431
        %595 = vst [vmem:[%s205 + $0xe8] sm:$0xff] %v561
        %596 = vst [vmem:[%s205 + $0xf0] sm:$0xff] %v434
        %597 = vst [vmem:[%s205 + $0xf8] sm:$0xff] %v564
        %v598 = vadd.f32 %v389, %v392
        %v599 = vadd.f32 %v598, %v395
        %v600 = vadd.f32 %v599, %v398
        %v601 = vadd.f32 %v600, %v401
        %v602 = vadd.f32 %v601, %v404
        %v603 = vadd.f32 %v602, %v407
        %v604 = vadd.f32 %v603, %v410
        %v605 = vadd.f32 %v604, %v413
        %v606 = vadd.f32 %v605, %v416
        %v607 = vadd.f32 %v606, %v419
        %v608 = vadd.f32 %v607, %v422
        %v609 = vadd.f32 %v608, %v425
        %v610 = vadd.f32 %v609, %v428
        %v611 = vadd.f32 %v610, %v431
        %v612 = vadd.f32 %v611, %v434
        %v613 = vrot.slane %v612, 4
        %v614 = vadd.f32 %v612, %v613
        %v615 = vrot.slane %v614, 2
        %v616 = vadd.f32 %v614, %v615
        %v617 = vrot.slane %v616, 1
        %v618 = vadd.f32 %v616, %v617
        %v619 = vadd.f32 %v519, %v522
        %v620 = vadd.f32 %v619, %v525
        %v621 = vadd.f32 %v620, %v528
        %v622 = vadd.f32 %v621, %v531
        %v623 = vadd.f32 %v622, %v534
        %v624 = vadd.f32 %v623, %v537
        %v625 = vadd.f32 %v624, %v540
        %v626 = vadd.f32 %v625, %v543
        %v627 = vadd.f32 %v626, %v546
        %v628 = vadd.f32 %v627, %v549
        %v629 = vadd.f32 %v628, %v552
        %v630 = vadd.f32 %v629, %v555
        %v631 = vadd.f32 %v630, %v558
        %v632 = vadd.f32 %v631, %v561
        %v633 = vadd.f32 %v632, %v564
        %v634 = vrot.slane %v633, 4
        %v635 = vadd.f32 %v633, %v634
        %v636 = vrot.slane %v635, 2
        %v637 = vadd.f32 %v635, %v636
        %v638 = vrot.slane %v637, 1
        %v639 = vadd.f32 %v637, %v638
        %v640 = vmul.f32 %v389, %v389
        %v641 = vmul.f32 %v519, %v519
        %v642 = vmul.f32 %v392, %v392
        %v643 = vmul.f32 %v522, %v522
        %v644 = vmul.f32 %v395, %v395
        %v645 = vmul.f32 %v525, %v525
        %v646 = vmul.f32 %v398, %v398
        %v647 = vmul.f32 %v528, %v528
        %v648 = vmul.f32 %v401, %v401
        %v649 = vmul.f32 %v531, %v531
        %v650 = vmul.f32 %v404, %v404
        %v651 = vmul.f32 %v534, %v534
        %v652 = vmul.f32 %v407, %v407
        %v653 = vmul.f32 %v537, %v537
        %v654 = vmul.f32 %v410, %v410
        %v655 = vmul.f32 %v540, %v540
        %v656 = vmul.f32 %v413, %v413
        %v657 = vmul.f32 %v543, %v543
        %v658 = vmul.f32 %v416, %v416
        %v659 = vmul.f32 %v546, %v546
        %v660 = vmul.f32 %v419, %v419
        %v661 = vmul.f32 %v549, %v549
        %v662 = vmul.f32 %v422, %v422
        %v663 = vmul.f32 %v552, %v552
        %v664 = vmul.f32 %v425, %v425
        %v665 = vmul.f32 %v555, %v555
        %v666 = vmul.f32 %v428, %v428
        %v667 = vmul.f32 %v558, %v558
        %v668 = vmul.f32 %v431, %v431
        %v669 = vmul.f32 %v561, %v561
        %v670 = vmul.f32 %v434, %v434
        %v671 = vmul.f32 %v564, %v564
        %v672 = vadd.f32 %v640, %v642
        %v673 = vadd.f32 %v672, %v644
        %v674 = vadd.f32 %v673, %v646
        %v675 = vadd.f32 %v674, %v648
        %v676 = vadd.f32 %v675, %v650
        %v677 = vadd.f32 %v676, %v652
        %v678 = vadd.f32 %v677, %v654
        %v679 = vadd.f32 %v678, %v656
        %v680 = vadd.f32 %v679, %v658
        %v681 = vadd.f32 %v680, %v660
        %v682 = vadd.f32 %v681, %v662
        %v683 = vadd.f32 %v682, %v664
        %v684 = vadd.f32 %v683, %v666
        %v685 = vadd.f32 %v684, %v668
        %v686 = vadd.f32 %v685, %v670
        %v687 = vrot.slane %v686, 4
        %v688 = vadd.f32 %v686, %v687
        %v689 = vrot.slane %v688, 2
        %v690 = vadd.f32 %v688, %v689
        %v691 = vrot.slane %v690, 1
        %v692 = vadd.f32 %v690, %v691
        %v693 = vadd.f32 %v641, %v643
        %v694 = vadd.f32 %v693, %v645
        %v695 = vadd.f32 %v694, %v647
        %v696 = vadd.f32 %v695, %v649
        %v697 = vadd.f32 %v696, %v651
        %v698 = vadd.f32 %v697, %v653
        %v699 = vadd.f32 %v698, %v655
        %v700 = vadd.f32 %v699, %v657
        %v701 = vadd.f32 %v700, %v659
        %v702 = vadd.f32 %v701, %v661
        %v703 = vadd.f32 %v702, %v663
        %v704 = vadd.f32 %v703, %v665
        %v705 = vadd.f32 %v704, %v667
        %v706 = vadd.f32 %v705, %v669
        %v707 = vadd.f32 %v706, %v671
        %v708 = vrot.slane %v707, 4
        %v709 = vadd.f32 %v707, %v708
        %v710 = vrot.slane %v709, 2
        %v711 = vadd.f32 %v709, %v710
        %v712 = vrot.slane %v711, 1
        %v713 = vadd.f32 %v711, %v712
        %v714 = vmul.f32 %v389, %v519
        %v715 = vmul.f32 %v392, %v522
        %v716 = vmul.f32 %v395, %v525
        %v717 = vmul.f32 %v398, %v528
        %v718 = vmul.f32 %v401, %v531
        %v719 = vmul.f32 %v404, %v534
        %v720 = vmul.f32 %v407, %v537
        %v721 = vmul.f32 %v410, %v540
        %v722 = vmul.f32 %v413, %v543
        %v723 = vmul.f32 %v416, %v546
        %v724 = vmul.f32 %v419, %v549
        %v725 = vmul.f32 %v422, %v552
        %v726 = vmul.f32 %v425, %v555
        %v727 = vmul.f32 %v428, %v558
        %v728 = vmul.f32 %v431, %v561
        %v729 = vmul.f32 %v434, %v564
        %v730 = vadd.f32 %v714, %v715
        %v731 = vadd.f32 %v730, %v716
        %v732 = vadd.f32 %v731, %v717
        %v733 = vadd.f32 %v732, %v718
        %v734 = vadd.f32 %v733, %v719
        %v735 = vadd.f32 %v734, %v720
        %v736 = vadd.f32 %v735, %v721
        %v737 = vadd.f32 %v736, %v722
        %v738 = vadd.f32 %v737, %v723
        %v739 = vadd.f32 %v738, %v724
        %v740 = vadd.f32 %v739, %v725
        %v741 = vadd.f32 %v740, %v726
        %v742 = vadd.f32 %v741, %v727
        %v743 = vadd.f32 %v742, %v728
        %v744 = vadd.f32 %v743, %v729
        %v745 = vrot.slane %v744, 4
        %v746 = vadd.f32 %v744, %v745
        %v747 = vrot.slane %v746, 2
        %v748 = vadd.f32 %v746, %v747
        %v749 = vrot.slane %v748, 1
        %v750 = vadd.f32 %v748, %v749
        %p751 = scmp.eq.s32.totalorder %s23, 0
        // Predicated region
        $region37: #{tpu_custom_call.1} parent=27 // pred_check
          %p752 = pneg %p751
        $region38: #{tpu_custom_call.1} parent=27 // pred_check_branch
          %754 = sbr.rel (%p752) target = $region40
        $region39: #{tpu_custom_call.1} parent=27 // pred_region
          %755 = vst [vmem:[#allocation8] sm:$0xff] 0.0
          %756 = vst [vmem:[#allocation8 + $0x8] sm:$0xff] 0.0
        $region40: #{tpu_custom_call.1} parent=27 // pred_fallthru
          _
        %v757 = vld [vmem:[#allocation8] ss:$8 sm:$0x3]
        %v760 = vrot.slane %v639, 7
        %vm761 = vcmask 1040384
        %v762 = vsel %vm761, %v618, %v760
        %v764 = vadd.f32 %v757, %v762
        %v765 = vlaneseq
        %vm766 = vcmp.ge.s32.totalorder %v765, 0
        %vm767 = vcmp.lt.s32.totalorder %v765, 256
        %vm768 = vmand %vm766, %vm767
        %769 = vst.msk [vmem:[#allocation8] ss:$8 sm:$0x3] %vm768, %v764
        %770 = vst.msk [vmem:[#allocation8] ss:$8 sm:$0x0] %vm768, %v764
        %s771 = scalar_lea.vmem [#allocation8], 1
        %v772 = vld [vmem:[%s771] ss:$8 sm:$0x3]
        %v775 = vrot.slane %v713, 7
        %v776 = vsel %vm761, %v692, %v775
        %v778 = vadd.f32 %v772, %v776
        %779 = vst.msk [vmem:[%s771] ss:$8 sm:$0x3] %vm768, %v778
        %780 = vst.msk [vmem:[%s771] ss:$8 sm:$0x0] %vm768, %v778
        %v781 = vld [vmem:[#allocation8 + $0x2] ss:$0 sm:$0xff]
        %v782 = vadd.f32 %v781, %v750
        %783 = vst [vmem:[#allocation8 + $0x2] sm:$0x1] %v782
        %s784 = sand.u32 %s78, 1
        %s785 = scalar_lea.sflag [#allocation4], %s784
        %s786 = sand.u32 %s78, 1
        %s787 = smul.addr %s786, 256
        %s788 = scalar_lea.vmem [#allocation7], %s787
        // Predicated region
        $region41: #{tpu_custom_call.1} parent=27 // pred_check
          %p789 = pneg %p88
        $region42: #{tpu_custom_call.1} parent=27 // pred_check_branch
          %791 = sbr.rel (%p789) target = $region44
        $region43: #{tpu_custom_call.1} parent=27 // pred_region
          %s792 = smul.u32 16, %s23
          %794 = vsyncadd %s785, 0
          %s795 = smul.addr %s792, 2
          %s796 = smul.addr %s795, 8
          %s797 = scalar_lea.hbm %s2, %s796
          %s798 = sshll.u32 %s788, 4
          %s799 = int_to_ptr.vmem [resolvable:$true] %s798
          %s800 = sshll.u32 %s797, 4
          %s801 = int_to_ptr.hbm [resolvable:$true] %s800
          %806 = dma.vmem_to_hbm [thread:$0]  %s799, 4096, %s801, %s785, 256, 256, 16
        $region44: #{tpu_custom_call.1} parent=27 // pred_fallthru
          _
        // Predicated region
        $region45: #{tpu_custom_call.1} parent=27 // pred_check
          %p807 = pneg %p109
        $region46: #{tpu_custom_call.1} parent=27 // pred_check_branch
          %809 = sbr.rel (%p807) target = $region48
        $region47: #{tpu_custom_call.1} parent=27 // pred_region
          %811 = vsyncadd [#allocation9], 0
          %s813 = sshll.u32 [#allocation8], 4
          %s814 = int_to_ptr.vmem [resolvable:$true] %s813
          %s815 = sshll.u32 %s3, 4
          %s816 = int_to_ptr.hbm [resolvable:$true] %s815
          %818 = dma.vmem_to_hbm [thread:$0]  %s814, 256, %s816, [#allocation9]
        $region48: #{tpu_custom_call.1} parent=27 // pred_fallthru
          _
        // Predicated region
        $region49: #{tpu_custom_call.1} parent=27 // pred_check
          %p819 = pneg %p109
        $region50: #{tpu_custom_call.1} parent=27 // pred_check_branch
          %821 = sbr.rel (%p819) target = $region52
        $region51: #{tpu_custom_call.1} parent=27 // pred_region
          %823 = dma.done [#allocation9], 256
        $region52: #{tpu_custom_call.1} parent=27 // pred_fallthru
          _
      $region28: #{tpu_custom_call.1} parent=5 // pred_fallthru
        _
      %p824 = scmp.le.s32.totalorder 2, %s18
      // Predicated region
      $region53: #{tpu_custom_call.1} parent=5 // pred_check
        %p825 = pneg %p824
      $region54: #{tpu_custom_call.1} parent=5 // pred_check_branch
        %827 = sbr.rel (%p825) target = $region56
      $region55: #{tpu_custom_call.1} parent=5 // pred_region
        %s828 = ssub.s32 %s18, 2
        // Predicated region
        $region57: #{tpu_custom_call.1} parent=55 // pred_check
          %p829 = pneg %p94
        $region58: #{tpu_custom_call.1} parent=55 // pred_check_branch
          %831 = sbr.rel (%p829) target = $region60
        $region59: #{tpu_custom_call.1} parent=55 // pred_region
          %s832 = sand.u32 %s79, 1
          %s833 = scalar_lea.sflag [#allocation4], %s832
          %s834 = sand.u32 %s79, 1
          %s835 = smul.addr %s834, 256
          %s836 = scalar_lea.vmem [#allocation7], %s835
          %838 = dma.done %s833, 4096
        $region60: #{tpu_custom_call.1} parent=55 // pred_fallthru
          _
      $region56: #{tpu_custom_call.1} parent=5 // pred_fallthru
        _
    $region6: #{tpu_custom_call.1} parent=1 // loop_footer
      %s22 = sadd.s32 1, %s18
    $region7: #{tpu_custom_call.1} parent=1 // loop_footer_branch
      %17 = sbr.rel target = $region3
    $region8: #{tpu_custom_call.1} parent=1 // loop_exit
      _
    %839 = vsyncpa [#allocation3], 1
    %s840 = scalar_lea.sflag [#allocation3], 1
    %841 = vsyncpa %s840, 1
    %842 = vsyncpa [#allocation6], 1
    %843 = vsyncpa [#allocation4], 1
    %s844 = scalar_lea.sflag [#allocation4], 1
    %845 = vsyncpa %s844, 1
    %846 = vsyncpa [#allocation9], 1

</llo_original>
